<compile_context>
chip_gen: v7x
topology: tpu7x:2x2x1
jax: 0.10.0
libtpu: 0.0.40
codegen_flags: <defaults>
</compile_context>

<pallas_src>
import dataclasses

import jax
import jax.numpy as jnp
from jax.experimental import pallas as pl
from jax.experimental.pallas import tpu as pltpu


def _round_up(x, m):
    return ((x + m - 1) // m) * m


def _cdiv(a, b):
    return (a + b - 1) // b


def _vmem_capacity_bytes():
    try:
        info = pltpu.get_tpu_info()
        cap = int(getattr(info, "vmem_capacity_bytes", 0))
        if cap > 0:
            return cap
    except Exception:
        pass
    return 64 * 1024 * 1024  # conservative (v7x-sized) fallback


def _num_tensorcores():
    # Best-effort; only used to decide whether to split the parallel grid so
    # both TensorCores of a v7x chip get work.  Falling back to 1 is harmless.
    try:
        info = pltpu.get_tpu_info()
        for attr in ("num_cores", "core_count", "num_tensorcores"):
            v = getattr(info, attr, None)
            if v:
                return int(v)
    except Exception:
        pass
    try:
        return max(1, int(getattr(jax.devices()[0], "num_cores", 1)))
    except Exception:
        return 1


def _choose_tile(total, align, cap, fits=None):
    """Largest multiple of `align` dividing `total`, <= cap, passing `fits`."""
    cap = max(align, min(cap, total))
    t = cap - (cap % align)
    while t >= align:
        if total % t == 0 and (fits is None or fits(t)):
            return t
        t -= align
    return align


# ---------------------------------------------------------------------------
# Kernels
# ---------------------------------------------------------------------------
def _projection_kernel(x_ref, w_ref, b_ref, o_ref):
    # Single-K fast path: one MXU call per output tile, no accumulator scratch.
    y = jnp.dot(x_ref[...], w_ref[...], preferred_element_type=jnp.float32)
    y = y + b_ref[...].astype(jnp.float32)
    o_ref[...] = jnp.tanh(y).astype(o_ref.dtype)


def _projection_kernel_kacc(x_ref, w_ref, b_ref, o_ref, acc_ref):
    # grid = (M tiles, N tiles, K tiles); K (reduction) is last / "arbitrary".
    k = pl.program_id(2)

    @pl.when(k == 0)
    def _():
        # Seed with the broadcast bias: saves the zeros fill and the
        # finalize-time bias add.
        acc_ref[...] = jnp.broadcast_to(
            b_ref[...].astype(jnp.float32), acc_ref.shape)

    acc_ref[...] += jnp.dot(x_ref[...], w_ref[...],
                            preferred_element_type=jnp.float32)

    @pl.when(k == pl.num_programs(2) - 1)
    def _():
        o_ref[...] = jnp.tanh(acc_ref[...]).astype(o_ref.dtype)


# ---------------------------------------------------------------------------
# One-time parameter prep (hoisted out of the hot path; cache & reuse)
# ---------------------------------------------------------------------------
@dataclasses.dataclass
class ProjectionParams:
    weight: jax.Array   # [k_pad, n_pad]  transposed / cast / padded
    bias: jax.Array     # [1, n_pad]      f32
    dim_in: int
    dim_out: int
    k_pad: int
    n_pad: int
    single_k: bool
    vmem_cap: int
    vmem_budget: int


def prepare_projection(w, b, *, compute_dtype=None):
    """Prep nn.Linear params (PyTorch [dim_out, dim_in] layout) once.

    Transpose / cast / pad the weight and bias OUTSIDE the hot path so the
    per-call wrapper does no weight-sized HBM round trips.  Reuse the returned
    params across calls that share the weight.  compute_dtype=jnp.bfloat16
    selects bf16 MXU feeds (f32 accumulation) — recommended on v5e.
    """
    dim_out, dim_in = w.shape
    w_dtype = (jnp.dtype(compute_dtype) if compute_dtype is not None
               else jnp.dtype(w.dtype))
    in_elem = w_dtype.itemsize

    cap = _vmem_capacity_bytes()
    budget = (3 * cap) // 4           # ~48 MiB on v7x, ~96 MiB on v5e/v6e

    # Single-K fast path iff a full-K x row-panel + weight column-panel
    # (double-buffered, worst-case 1024 rows x 128-lane tn) fits the budget.
    single_k = (2 * dim_in * (1024 + 128) * in_elem
                + 2 * 1024 * 128 * 4 + 2 * 8 * 128 * 4) <= budget

    n_pad = _round_up(dim_out, 128)
    k_pad = dim_in if single_k else _round_up(dim_in, 128)

    w_t = jnp.asarray(w, dtype=w_dtype).T            # [dim_in, dim_out]
    if n_pad != dim_out or k_pad != dim_in:
        w_t = jnp.pad(w_t, ((0, k_pad - dim_in), (0, n_pad - dim_out)))
    b_p = jnp.asarray(b, dtype=jnp.float32).reshape(1, dim_out)
    if n_pad != dim_out:
        b_p = jnp.pad(b_p, ((0, 0), (0, n_pad - dim_out)))

    return ProjectionParams(weight=w_t, bias=b_p, dim_in=dim_in,
                            dim_out=dim_out, k_pad=k_pad, n_pad=n_pad,
                            single_k=single_k, vmem_cap=cap,
                            vmem_budget=budget)


# ---------------------------------------------------------------------------
# Hot-path apply
# ---------------------------------------------------------------------------
def projection_apply(params, x):
    """y = tanh(x @ W^T + b); x: [..., dim_in] (leading dims flattened)."""
    orig_shape = x.shape
    if x.ndim != 2:
        x = x.reshape(-1, orig_shape[-1])
    M, dim_in = x.shape
    assert dim_in == params.dim_in
    out_dtype = x.dtype

    w, b = params.weight, params.bias
    if x.dtype != w.dtype:
        x = x.astype(w.dtype)

    in_elem = jnp.dtype(w.dtype).itemsize
    out_elem = jnp.dtype(out_dtype).itemsize
    sub = 16 if in_elem < 4 else 8            # bf16 packs 16 rows per vreg
    budget = params.vmem_budget
    K_pad, N_pad = params.k_pad, params.n_pad

    # ---- row (M) tiling: single tile when modest, minimal padding otherwise
    tm_target = 512 if in_elem >= 4 else 1024
    M_pad = _round_up(M, sub)
    if M_pad <= tm_target:
        tm = M_pad
    else:
        m_tiles = _cdiv(M_pad, tm_target)
        tm = _round_up(_cdiv(M_pad, m_tiles), sub)
        M_pad = _cdiv(M_pad, tm) * tm
    m_tiles = M_pad // tm

    # ---- column (N) / depth (K) tiling, sized against the VMEM budget
    if params.single_k:
        tk = K_pad                            # full K, no reduction axis

        def fits(tn_):
            return (2 * (tm * tk + tk * tn_) * in_elem
                    + 2 * tm * tn_ * out_elem + 2 * 8 * tn_ * 4) <= budget

        tn = _choose_tile(N_pad, 128, 2048, fits)
    else:
        tn = _choose_tile(N_pad, 128, 512)
        tk_align = 256 if (in_elem < 4 and K_pad % 256 == 0) else 128

        def fits(tk_):
            return (2 * (tm * tk_ + tk_ * tn) * in_elem
                    + 2 * tm * tn * out_elem
                    + tm * tn * 4 + 2 * 8 * tn * 4) <= budget

        tk = _choose_tile(K_pad, tk_align, 2048, fits)

    n_tiles = N_pad // tn

    # ---- give both TensorCores work on multi-core chips (v7x)
    if m_tiles * n_tiles < 2 and _num_tensorcores() >= 2:
        if N_pad >= 256:
            tn = _choose_tile(N_pad, 128, N_pad // 2)
            n_tiles = N_pad // tn
        elif M_pad >= 2 * sub:
            tm = _round_up(_cdiv(M_pad, 2), sub)
            M_pad = _cdiv(M_pad, tm) * tm
            m_tiles = M_pad // tm

    # ---- per-call x padding (skipped entirely in the aligned common case)
    if M_pad != M or K_pad != dim_in:
        x = jnp.pad(x, ((0, M_pad - M), (0, K_pad - dim_in)))

    # ---- VMEM limit: actual working set + headroom, within physical VMEM
    work = (2 * (tm * tk + tk * tn) * in_elem
            + 2 * tm * tn * out_elem + 2 * 8 * tn * 4
            + (0 if params.single_k else tm * tn * 4))
    vmem_limit = int(min(max(work + work // 4, 32 * 1024 * 1024),
                         budget + 16 * 1024 * 1024,
                         params.vmem_cap - 8 * 1024 * 1024))

    if params.single_k:
        grid = (m_tiles, n_tiles)
        kernel = _projection_kernel
        in_specs = [
            pl.BlockSpec((tm, tk), lambda i, j: (i, 0)),
            pl.BlockSpec((tk, tn), lambda i, j: (0, j)),
            pl.BlockSpec((1, tn), lambda i, j: (0, j)),
        ]
        out_specs = pl.BlockSpec((tm, tn), lambda i, j: (i, j))
        scratch = []
        dims = ("parallel", "parallel")
    else:
        grid = (m_tiles, n_tiles, K_pad // tk)
        kernel = _projection_kernel_kacc
        in_specs = [
            pl.BlockSpec((tm, tk), lambda i, j, k: (i, k)),
            pl.BlockSpec((tk, tn), lambda i, j, k: (k, j)),
            pl.BlockSpec((1, tn), lambda i, j, k: (0, j)),
        ]
        out_specs = pl.BlockSpec((tm, tn), lambda i, j, k: (i, j))
        scratch = [pltpu.VMEM((tm, tn), jnp.float32)]
        dims = ("parallel", "parallel", "arbitrary")

    out = pl.pallas_call(
        kernel,
        out_shape=jax.ShapeDtypeStruct((M_pad, N_pad), out_dtype),
        grid_spec=pltpu.PrefetchScalarGridSpec(
            num_scalar_prefetch=0,
            grid=grid,
            in_specs=in_specs,
            out_specs=out_specs,
            scratch_shapes=scratch,
        ),
        compiler_params=pltpu.CompilerParams(
            dimension_semantics=dims,
            vmem_limit_bytes=vmem_limit,
        ),
    )(x, w, b)

    if M_pad != M or N_pad != params.dim_out:
        out = out[:M, :params.dim_out]
    if len(orig_shape) != 2:
        out = out.reshape(*orig_shape[:-1], params.dim_out)
    return out


def projection(x, w, b, *, compute_dtype=None):
    """Convenience wrapper: y = tanh(x @ w.T + b), w in PyTorch layout."""
    return projection_apply(
        prepare_projection(w, b, compute_dtype=compute_dtype), x)


if __name__ == "__main__":
    key = jax.random.PRNGKey(0)
    k_x, k_w, k_b, k_x2 = jax.random.split(key, 4)

    # --- small, module-consistent shapes (aligned fast path, no x padding) ---
    M, dim_in, dim_out = 8, 32, 32
    x = jax.random.normal(k_x, (M, dim_in), dtype=jnp.float32)
    bound = 1.0 / (dim_in ** 0.5)
    w = jax.random.uniform(k_w, (dim_out, dim_in), minval=-bound, maxval=bound,
                           dtype=jnp.float32)   # PyTorch weight layout [out, in]
    b = jax.random.uniform(k_b, (dim_out,), minval=-bound, maxval=bound,
                           dtype=jnp.float32)

    params = prepare_projection(w, b)          # hoisted weight prep (cacheable)
    out = jax.block_until_ready(projection_apply(params, x))
    ref = jnp.tanh(x @ w.T + b)
    assert out.shape == (M, dim_out)
    assert jnp.allclose(out, ref, atol=1e-5, rtol=1e-5)

    # --- larger, non-aligned shapes: minimal-pad single-tile path ---
    M2, din2, dout2 = 300, 200, 300
    x2 = jax.random.normal(k_x2, (M2, din2), dtype=jnp.float32)
    bound2 = 1.0 / (din2 ** 0.5)
    w2 = jax.random.uniform(k_w, (dout2, din2), minval=-bound2, maxval=bound2,
                            dtype=jnp.float32)
    b2 = jax.random.uniform(k_b, (dout2,), minval=-bound2, maxval=bound2,
                            dtype=jnp.float32)
    params2 = prepare_projection(w2, b2)
    out2 = jax.block_until_ready(projection_apply(params2, x2))
    ref2 = jnp.tanh(x2 @ w2.T + b2)
    assert out2.shape == (M2, dout2)
    assert jnp.allclose(out2, ref2, atol=1e-3, rtol=1e-3)

    # --- reuse of cached params on a second batch (no per-call weight prep) ---
    x3 = jax.random.normal(k_x, (64, din2), dtype=jnp.float32)
    out3 = jax.block_until_ready(projection_apply(params2, x3))
    assert jnp.allclose(out3, jnp.tanh(x3 @ w2.T + b2), atol=1e-3, rtol=1e-3)

    # --- bf16 compute path (v5e/v6e/v7x MXU feeds), f32 accumulation ---
    params_bf16 = prepare_projection(w2, b2, compute_dtype=jnp.bfloat16)
    out_bf16 = jax.block_until_ready(projection_apply(params_bf16, x2))
    assert out_bf16.shape == (M2, dout2)
    assert jnp.allclose(out_bf16, ref2, atol=5e-2, rtol=5e-2)

    print("KERNEL_OK")
</pallas_src>

<mosaic_0001>
module attributes {stable_mosaic.version = 11 : i64} {
  func.func @_projection_kernel(%arg0: i32, %arg1: i32, %arg2: memref<8x32xf32, #tpu.memory_space<vmem>>, %arg3: memref<32x128xf32, #tpu.memory_space<vmem>>, %arg4: memref<1x128xf32, #tpu.memory_space<vmem>>, %arg5: memref<8x128xf32, #tpu.memory_space<vmem>>) attributes {dimension_semantics = [#tpu.dimension_semantics<parallel>, #tpu.dimension_semantics<parallel>], iteration_bounds = array<i64: 1, 1>, scalar_prefetch = 0 : i64, scratch_operands = 0 : i64, tpu.core_type = #tpu.core_type<tc>, window_params = [{transform_indices = @transform_0, window_bounds = array<i64: 8, 32>}, {transform_indices = @transform_1, window_bounds = array<i64: 32, 128>}, {transform_indices = @transform_2, window_bounds = array<i64: 1, 128>}, {transform_indices = @transform_3, window_bounds = array<i64: 8, 128>}]} {
    %c0 = arith.constant 0 : index
    %c0_0 = arith.constant 0 : index
    %0 = vector.load %arg2[%c0, %c0_0] : memref<8x32xf32, #tpu.memory_space<vmem>>, vector<8x32xf32>
    %c0_1 = arith.constant 0 : index
    %c0_2 = arith.constant 0 : index
    %1 = vector.load %arg3[%c0_1, %c0_2] : memref<32x128xf32, #tpu.memory_space<vmem>>, vector<32x128xf32>
    %cst = arith.constant dense<0.000000e+00> : vector<8x128xf32>
    %2 = tpu.matmul %0, %1, %cst {dimension_numbers = #tpu.dot_dimension_numbers<[1], [0], [0], [1], [0, 0, 1, 1], [], []>} : vector<8x32xf32>, vector<32x128xf32>, vector<8x128xf32> -> vector<8x128xf32>
    %c0_3 = arith.constant 0 : index
    %c0_4 = arith.constant 0 : index
    %3 = vector.load %arg4[%c0_3, %c0_4] : memref<1x128xf32, #tpu.memory_space<vmem>>, vector<1x128xf32>
    %4 = vector.broadcast %3 : vector<1x128xf32> to vector<8x128xf32>
    %5 = arith.addf %2, %4 : vector<8x128xf32>
    %6 = math.tanh %5 : vector<8x128xf32>
    %c0_5 = arith.constant 0 : index
    %c0_6 = arith.constant 0 : index
    %7 = vector.load %arg5[%c0_5, %c0_6] : memref<8x128xf32, #tpu.memory_space<vmem>>, vector<8x128xf32>
    tpu.vector_store %arg5[%c0_5, %c0_6], %6 {strides = array<i32>} : memref<8x128xf32, #tpu.memory_space<vmem>>, vector<8x128xf32>,
    return
  }
  func.func @transform_0(%arg0: i32, %arg1: i32) -> (i32, i32) {
    %c0_i32 = arith.constant 0 : i32
    %c0_i32_0 = arith.constant 0 : i32
    return %arg0, %c0_i32 : i32, i32
  }
  func.func @transform_1(%arg0: i32, %arg1: i32) -> (i32, i32) {
    %c0_i32 = arith.constant 0 : i32
    %c0_i32_0 = arith.constant 0 : i32
    return %c0_i32, %arg1 : i32, i32
  }
  func.func @transform_2(%arg0: i32, %arg1: i32) -> (i32, i32) {
    %c0_i32 = arith.constant 0 : i32
    %c0_i32_0 = arith.constant 0 : i32
    return %c0_i32, %arg1 : i32, i32
  }
  func.func @transform_3(%arg0: i32, %arg1: i32) -> (i32, i32) {
    %c0_i32 = arith.constant 0 : i32
    return %arg0, %arg1 : i32, i32
  }
}

</mosaic_0001>

<llo_original>
// kernel: tpu_custom_call.1
$region0: #{tpu_custom_call.1}
  #allocation0 [shape = 'u32[]', space=smem, size = 0x4, offset = 0x4, fixed_abs, tag = 'smem constant byte address 0x4 - core index']
  #allocation1 [shape = 'u32[144,128]{1,0:T(1,128)}', space=vmem, size = 0x12000, scoped, tag = 'internal scratch']
  %s0 = inlined_call_operand.hbm [shape: f32[8,32], index: 0, kind: input, shape index: {}]
  %s1 = inlined_call_operand.hbm [shape: f32[32,128], index: 1, kind: input, shape index: {}]
  %s2 = inlined_call_operand.vmem [shape: f32[1,128], index: 2, kind: input, shape index: {}]
  %s3 = inlined_call_operand.hbm [shape: f32[8,128], index: 3, kind: output, shape index: {}]
  %s4 = sld [smem:[#allocation0]]
  $region30: #{tpu_custom_call.1} parent=0
    _
  %s6 = ssub.s32 1, %s4
  %s7 = scalar_select 0, %s6, %s4
  $region1: #{tpu_custom_call.1} parent=0
    #allocation2 [shape = 'u8[4096]{0}', space=vmem, size = 0x1000, scoped, tag = 'input window, operand 0, single buffered']
    #allocation3 [shape = 's32[1]{0}', space=sflag, size = 0x4, scoped, tag = 'scoped memory for tpu_custom_call.1']
    #allocation4 [shape = 's32[1]{0}', space=sflag, size = 0x4, scoped, tag = 'scoped memory for tpu_custom_call.1']
    #allocation5 [shape = 'u8[16384]{0}', space=vmem, size = 0x4000, scoped, tag = 'input window, operand 1, single buffered']
    #allocation6 [shape = 's32[1]{0}', space=sflag, size = 0x4, scoped, tag = 'scoped memory for tpu_custom_call.1']
    #allocation7 [shape = 'u8[4096]{0}', space=vmem, size = 0x1000, scoped, tag = 'output window, operand 0, single buffered']
    %8 = vsyncpa [#allocation3], 0
    %9 = vsyncpa [#allocation6], 0
    %10 = vsyncpa [#allocation4], 0
    // Predicated region
    $region2: #{tpu_custom_call.1} parent=1 // pred_check
      _
    $region3: #{tpu_custom_call.1} parent=1 // pred_check_branch
      %12 = sbr.rel (0) target = $region5
    $region4: #{tpu_custom_call.1} parent=1 // pred_region
      %s14 = ssub.s32 128, 128
      %15 = vsyncadd [#allocation3], %s14
      %s17 = sshll.u32 [#allocation2], 4
      %s18 = int_to_ptr.vmem [resolvable:$true] %s17
      %20 = dma.hbm_to_vmem [thread:$0]  %s0, 128, %s18, [#allocation3]
    $region5: #{tpu_custom_call.1} parent=1 // pred_fallthru
      _
    // Predicated region
    $region6: #{tpu_custom_call.1} parent=1 // pred_check
      _
    $region7: #{tpu_custom_call.1} parent=1 // pred_check_branch
      %22 = sbr.rel (0) target = $region9
    $region8: #{tpu_custom_call.1} parent=1 // pred_region
      %s24 = ssub.s32 512, 512
      %25 = vsyncadd [#allocation6], %s24
      %s26 = sshll.u32 [#allocation5], 4
      %s27 = int_to_ptr.vmem [resolvable:$true] %s26
      %32 = dma.hbm_to_vmem [thread:$0]  %s1, 512, %s27, [#allocation6], 128, 128, 8
    $region9: #{tpu_custom_call.1} parent=1 // pred_fallthru
      _
    // Predicated region
    $region10: #{tpu_custom_call.1} parent=1 // pred_check
      _
    $region11: #{tpu_custom_call.1} parent=1 // pred_check_branch
      %34 = sbr.rel (0) target = $region13
    $region12: #{tpu_custom_call.1} parent=1 // pred_region
      _
    $region13: #{tpu_custom_call.1} parent=1 // pred_fallthru
      _
    // Predicated region
    $region14: #{tpu_custom_call.1} parent=1 // pred_check
      _
    $region15: #{tpu_custom_call.1} parent=1 // pred_check_branch
      %36 = sbr.rel (0) target = $region17
    $region16: #{tpu_custom_call.1} parent=1 // pred_region
      %37 = dma.done [#allocation3], 128
    $region17: #{tpu_custom_call.1} parent=1 // pred_fallthru
      _
    // Predicated region
    $region18: #{tpu_custom_call.1} parent=1 // pred_check
      _
    $region19: #{tpu_custom_call.1} parent=1 // pred_check_branch
      %39 = sbr.rel (0) target = $region21
    $region20: #{tpu_custom_call.1} parent=1 // pred_region
      %40 = dma.done [#allocation6], 512
    $region21: #{tpu_custom_call.1} parent=1 // pred_fallthru
      _
    %v41 = vld [vmem:[#allocation2] sm:$0xff]
    %v42 = vld [vmem:[#allocation5] sm:$0xff]
    %v43 = vld [vmem:[#allocation5 + $0x8] sm:$0xff]
    %v44 = vld [vmem:[#allocation5 + $0x10] sm:$0xff]
    %v45 = vld [vmem:[#allocation5 + $0x18] sm:$0xff]
    %v46 = vld [vmem:[%s2] sm:$0x1]
    %v48 = vlaneseq
    %v49 = vshrl.u32 %v48, 7
    %v50 = vsub.s32 0, %v49
    %v51 = vrot.slane %v46, %v50
    %vm53 = vcmask 261120
    %v55 = vsel %vm53, %v41, 0
    %57 = vmatprep.subr.mxu0 0.0
    %58 = vmatpush1.msra.mxu0 %v42
    %59 = vmatprep.subr.mxu0 0.0
    %60 = vmatpush1.msra.mxu0 %v43
    %61 = vmatprep.subr.mxu0 0.0
    %62 = vmatpush1.msra.mxu0 %v44
    %63 = vmatprep.subr.mxu0 0.0
    %64 = vmatpush1.msra.mxu0 %v45
    %65 = vmatprep.subr.mxu0 0.0
    %66 = vmatpush1.msra.mxu0 0.0
    %67 = vmatprep.subr.mxu0 0.0
    %68 = vmatpush1.msra.mxu0 0.0
    %69 = vmatprep.subr.mxu0 0.0
    %70 = vmatpush1.msra.mxu0 0.0
    %71 = vmatprep.subr.mxu0 0.0
    %72 = vmatpush1.msra.mxu0 0.0
    %73 = vmatprep.subr.mxu0 0.0
    %74 = vmatpush1.msra.mxu0 0.0
    %75 = vmatprep.subr.mxu0 0.0
    %76 = vmatpush1.msra.mxu0 0.0
    %77 = vmatprep.subr.mxu0 0.0
    %78 = vmatpush1.msra.mxu0 0.0
    %79 = vmatprep.subr.mxu0 0.0
    %80 = vmatpush1.msra.mxu0 0.0
    %81 = vmatprep.subr.mxu0 0.0
    %82 = vmatpush1.msra.mxu0 0.0
    %83 = vmatprep.subr.mxu0 0.0
    %84 = vmatpush1.msra.mxu0 0.0
    %85 = vmatprep.subr.mxu0 0.0
    %86 = vmatpush1.msra.mxu0 0.0
    %87 = vmatprep.subr.mxu0 0.0
    %88 = vmatpush1.msra.mxu0 0.0
    %89 = vmatprep.subr.mxu0 0.0
    %90 = vmatpush1.msra.mxu0 0.0
    %91 = vmatprep.subr.mxu0 0.0
    %92 = vmatpush1.msra.mxu0 0.0
    %93 = vmatprep.subr.mxu0 0.0
    %94 = vmatpush1.msra.mxu0 0.0
    %95 = vmatprep.subr.mxu0 0.0
    %96 = vmatpush1.msra.mxu0 0.0
    %97 = vmatprep.subr.mxu0 0.0
    %98 = vmatpush1.msra.mxu0 0.0
    %99 = vmatprep.subr.mxu0 0.0
    %100 = vmatpush1.msra.mxu0 0.0
    %101 = vmatprep.subr.mxu0 0.0
    %102 = vmatpush1.msra.mxu0 0.0
    %103 = vmatprep.subr.mxu0 0.0
    %104 = vmatpush1.msra.mxu0 0.0
    %105 = vmatprep.subr.mxu0 0.0
    %106 = vmatpush1.msra.mxu0 0.0
    %107 = vmatprep.subr.mxu0 0.0
    %108 = vmatpush1.msra.mxu0 0.0
    %109 = vmatprep.subr.mxu0 0.0
    %110 = vmatpush1.msra.mxu0 0.0
    %111 = vmatprep.subr.mxu0 0.0
    %112 = vmatpush1.msra.mxu0 0.0
    %113 = vmatprep.subr.mxu0 0.0
    %114 = vmatpush1.msra.mxu0 0.0
    %115 = vmatprep.subr.mxu0 0.0
    %116 = vmatpush1.msra.mxu0 0.0
    %117 = vmatprep.subr.mxu0 0.0
    %118 = vmatpush1.msra.mxu0 0.0
    %119 = vmatprep.subr.mxu0 0.0
    %120 = vmatpush1.msra.mxu0 0.0
    %121 = vmatprep.mubr.f32.mxu0 0.0
    %122 = vmatmul.mubr.f32.gmra.mrb[0].mxu0 %v55
    %v123 = vpop.f32.mrb[0].mxu0
    %v124 = vadd.f32 %v51, %v123
    %v125 = vpop.f32.mrb[0].mxu0
    %126 = vdwg.mxu0
    %v127 = vtanh.pop %v124
    %128 = vst [vmem:[#allocation7] sm:$0xff] %v127
    // Predicated region
    $region22: #{tpu_custom_call.1} parent=1 // pred_check
      _
    $region23: #{tpu_custom_call.1} parent=1 // pred_check_branch
      %130 = sbr.rel (0) target = $region25
    $region24: #{tpu_custom_call.1} parent=1 // pred_region
      %s132 = ssub.s32 128, 128
      %133 = vsyncadd [#allocation4], %s132
      %s135 = sshll.u32 [#allocation7], 4
      %s136 = int_to_ptr.vmem [resolvable:$true] %s135
      %138 = dma.vmem_to_hbm [thread:$0]  %s136, 128, %s3, [#allocation4]
    $region25: #{tpu_custom_call.1} parent=1 // pred_fallthru
      _
    // Predicated region
    $region26: #{tpu_custom_call.1} parent=1 // pred_check
      _
    $region27: #{tpu_custom_call.1} parent=1 // pred_check_branch
      %140 = sbr.rel (0) target = $region29
    $region28: #{tpu_custom_call.1} parent=1 // pred_region
      %141 = dma.done [#allocation4], 128
    $region29: #{tpu_custom_call.1} parent=1 // pred_fallthru
      _
    %142 = vsyncpa [#allocation3], 1
    %143 = vsyncpa [#allocation6], 1
    %144 = vsyncpa [#allocation4], 1

</llo_original>
